<compile_context>
chip_gen: v7x
topology: tpu7x:2x2x1
jax: 0.10.0
libtpu: 0.0.40
codegen_flags: <defaults>
</compile_context>

<pallas_src>
import functools

import jax
import jax.numpy as jnp
from jax.experimental import pallas as pl
from jax.experimental.pallas import tpu as pltpu


_EPS = 1e-12  # F.normalize default eps


def _round_up(a, b):
    return ((a + b - 1) // b) * b


def normed_linear_kernel(x_ref, w_ref, winv_ref, o_ref, acc_ref, xsq_ref, *,
                         eps, mxu_dtype):
    k = pl.program_id(2)

    @pl.when(k == 0)
    def _():
        acc_ref[...] = jnp.zeros_like(acc_ref)
        xsq_ref[...] = jnp.zeros_like(xsq_ref)

    x = x_ref[...]   # (tm, tk), native dtype
    w = w_ref[...]   # (tk, tn), native dtype

    # Feed the MXU native-dtype tiles; f32 accumulate via preferred_element_type.
    # mxu_dtype (e.g. jnp.bfloat16) is an opt-in accuracy/speed tradeoff for
    # f32 inputs.
    if mxu_dtype is not None:
        xd = x.astype(mxu_dtype)
        wd = w.astype(mxu_dtype)
    else:
        xd, wd = x, w
    acc_ref[...] += jnp.dot(xd, wd, preferred_element_type=jnp.float32)

    # Row sum-of-squares of x, accumulated in f32 along K.  (Recomputed per
    # j-block: safe under megacore sharding of the parallel j axis, and the
    # redundancy factor Np/tn is 1 for typical classifier-head widths.)
    xf = x.astype(jnp.float32)
    xsq_ref[...] += jnp.sum(xf * xf, axis=1, keepdims=True)   # (tm, 1)

    @pl.when(k == pl.num_programs(2) - 1)
    def _():
        # rsqrt(max(s, eps^2)) == 1 / max(sqrt(s), eps); runs on the EUP slot.
        inv_x = jax.lax.rsqrt(jnp.maximum(xsq_ref[...], eps * eps))   # (tm, 1)
        o_ref[...] = (acc_ref[...] * inv_x * winv_ref[...]).astype(o_ref.dtype)


def normed_linear(x, w, *, eps=_EPS, mxu_dtype=None,
                  tm_target=512, tn_target=512, tk_target=512):
    """x: (M, K), w: (K, N) -> normalize(x, dim=1) @ normalize(w, dim=0)."""
    M, K = x.shape
    Kw, N = w.shape
    assert K == Kw, (K, Kw)

    # Tile sizes: respect TPU layout minimums (sublane x8, lane x128), clamp
    # so tiny inputs don't over-pad, and prefer multiples of 256 for the
    # output tile once past one MXU pass (v6e/v7x MXUs are 2x256x256).
    tm = min(tm_target, _round_up(M, 8))
    tn = min(tn_target, _round_up(N, 128))
    tk = min(tk_target, _round_up(K, 128))
    if tm > 256:
        tm = min(tm_target, _round_up(tm, 256))
    if tn > 256:
        tn = min(tn_target, _round_up(tn, 256))

    Mp, Np, Kp = _round_up(M, tm), _round_up(N, tn), _round_up(K, tk)

    # Zero-padding is exact: pad contributes 0 to dot products and to the
    # squared-norm accumulators; padded rows/cols are sliced off at the end.
    # Tile-aligned inputs skip this path entirely (no extra HBM traffic).
    xp = x if (Mp, Kp) == (M, K) else jnp.pad(x, ((0, Mp - M), (0, Kp - K)))
    wp = w if (Kp, Np) == (K, N) else jnp.pad(w, ((0, Kp - K), (0, Np - N)))

    # Precompute W column inverse-norms once (one K x N pass) instead of
    # re-accumulating them inside the kernel for every row-block (Mp/tm x).
    wsq = jnp.sum(wp.astype(jnp.float32) ** 2, axis=0, keepdims=True)      # (1, Np)
    winv = jax.lax.rsqrt(jnp.maximum(wsq, jnp.float32(eps) ** 2))          # (1, Np)

    grid = (Mp // tm, Np // tn, Kp // tk)

    x_bytes = jnp.dtype(x.dtype).itemsize
    w_bytes = jnp.dtype(w.dtype).itemsize
    o_bytes = jnp.dtype(x.dtype).itemsize

    # Explicit VMEM budget for the larger tiles: double-buffered x/w/out/winv
    # tiles + f32 accumulator scratch, with headroom; capped at 48 MiB so the
    # same config stays safe on v7x (64 MiB physical VMEM per TensorCore).
    vmem_needed = (2 * tm * tk * x_bytes + 2 * tk * tn * w_bytes
                   + 2 * tm * tn * o_bytes + 2 * tn * 4
                   + tm * tn * 4 + tm * 4)
    vmem_limit = int(min(48 * 2**20, max(1.5 * vmem_needed + (2 << 20), 16 * 2**20)))

    # Realistic streaming estimate: x is re-read Np/tn times, w Mp/tm times.
    bytes_accessed = ((Np // tn) * Mp * Kp * x_bytes
                      + (Mp // tm) * Kp * Np * w_bytes
                      + Mp * Np * o_bytes
                      + grid[0] * grid[1] * grid[2] * tn * 4)

    out = pl.pallas_call(
        functools.partial(normed_linear_kernel, eps=eps, mxu_dtype=mxu_dtype),
        out_shape=jax.ShapeDtypeStruct((Mp, Np), x.dtype),
        grid_spec=pltpu.PrefetchScalarGridSpec(
            num_scalar_prefetch=0,
            grid=grid,
            in_specs=[
                pl.BlockSpec((tm, tk), lambda i, j, k: (i, k)),   # x tile
                pl.BlockSpec((tk, tn), lambda i, j, k: (k, j)),   # w tile
                pl.BlockSpec((1, tn), lambda i, j, k: (0, j)),    # 1/||w_col||
            ],
            out_specs=pl.BlockSpec((tm, tn), lambda i, j, k: (i, j)),
            scratch_shapes=[
                pltpu.VMEM((tm, tn), jnp.float32),   # f32 matmul accumulator
                pltpu.VMEM((tm, 1), jnp.float32),    # row sum-of-squares of x
            ],
        ),
        compiler_params=pltpu.CompilerParams(
            dimension_semantics=("parallel", "parallel", "arbitrary"),
            vmem_limit_bytes=vmem_limit,
        ),
        cost_estimate=pl.CostEstimate(
            flops=2 * Mp * Np * Kp + 2 * Mp * Kp * (Np // tn),
            transcendentals=Mp * (Np // tn),
            bytes_accessed=bytes_accessed,
        ),
    )(xp, wp, winv)

    return out[:M, :N]


def normed_linear_reference(x, w, eps=_EPS):
    """Pure-JAX reference (same math as the PyTorch module)."""
    xn = x / jnp.maximum(jnp.linalg.norm(x, axis=1, keepdims=True), eps)
    wn = w / jnp.maximum(jnp.linalg.norm(w, axis=0, keepdims=True), eps)
    return xn @ wn


if __name__ == "__main__":
    key = jax.random.PRNGKey(0)
    kx, kw = jax.random.split(key)

    batch, in_features, out_features = 4, 32, 16
    x = jax.random.normal(kx, (batch, in_features), dtype=jnp.float32)
    # Weight matching the module's init shape (in_features, out_features);
    # uniform(-1, 1).  The renorm/scale in the PyTorch init is irrelevant to
    # the forward result since columns are re-normalized anyway.
    w = jax.random.uniform(kw, (in_features, out_features),
                           dtype=jnp.float32, minval=-1.0, maxval=1.0)

    out = jax.block_until_ready(normed_linear(x, w))
    ref = normed_linear_reference(x, w)

    assert out.shape == (batch, out_features)
    assert jnp.allclose(out, ref, atol=1e-5, rtol=1e-5), "mismatch vs reference"
    print("KERNEL_OK")
</pallas_src>

<mosaic_0001>
module attributes {stable_mosaic.version = 11 : i64} {
  func.func @normed_linear_kernel(%arg0: i32, %arg1: i32, %arg2: i32, %arg3: memref<8x128xf32, #tpu.memory_space<vmem>>, %arg4: memref<128x128xf32, #tpu.memory_space<vmem>>, %arg5: memref<1x128xf32, #tpu.memory_space<vmem>>, %arg6: memref<8x128xf32, #tpu.memory_space<vmem>>, %arg7: memref<8x128xf32, #tpu.memory_space<vmem>>, %arg8: memref<8x1xf32, #tpu.memory_space<vmem>>) attributes {dimension_semantics = [#tpu.dimension_semantics<parallel>, #tpu.dimension_semantics<parallel>, #tpu.dimension_semantics<arbitrary>], iteration_bounds = array<i64: 1, 1, 1>, scalar_prefetch = 0 : i64, scratch_operands = 2 : i64, tpu.core_type = #tpu.core_type<tc>, window_params = [{transform_indices = @transform_0, window_bounds = array<i64: 8, 128>}, {transform_indices = @transform_1, window_bounds = array<i64: 128, 128>}, {transform_indices = @transform_2, window_bounds = array<i64: 1, 128>}, {transform_indices = @transform_3, window_bounds = array<i64: 8, 128>}]} {
    %c0_i32 = arith.constant 0 : i32
    %0 = arith.cmpi eq, %arg2, %c0_i32 : i32
    %1 = arith.extui %0 : i1 to i32
    %c0_i32_0 = arith.constant 0 : i32
    %2 = arith.cmpi ne, %1, %c0_i32_0 : i32
    scf.if %2 {
      %cst_15 = arith.constant 0.000000e+00 : f32
      %18 = vector.broadcast %cst_15 : f32 to vector<8x128xf32>
      %c0_16 = arith.constant 0 : index
      %c0_17 = arith.constant 0 : index
      %19 = vector.load %arg7[%c0_16, %c0_17] : memref<8x128xf32, #tpu.memory_space<vmem>>, vector<8x128xf32>
      tpu.vector_store %arg7[%c0_16, %c0_17], %18 {strides = array<i32>} : memref<8x128xf32, #tpu.memory_space<vmem>>, vector<8x128xf32>,
      %cst_18 = arith.constant 0.000000e+00 : f32
      %20 = vector.broadcast %cst_18 : f32 to vector<8x1xf32>
      %c0_19 = arith.constant 0 : index
      %c0_20 = arith.constant 0 : index
      %21 = vector.load %arg8[%c0_19, %c0_20] : memref<8x1xf32, #tpu.memory_space<vmem>>, vector<8x1xf32>
      tpu.vector_store %arg8[%c0_19, %c0_20], %20 {strides = array<i32>} : memref<8x1xf32, #tpu.memory_space<vmem>>, vector<8x1xf32>,
    } else {
    }
    %c0 = arith.constant 0 : index
    %c0_1 = arith.constant 0 : index
    %3 = vector.load %arg3[%c0, %c0_1] : memref<8x128xf32, #tpu.memory_space<vmem>>, vector<8x128xf32>
    %c0_2 = arith.constant 0 : index
    %c0_3 = arith.constant 0 : index
    %4 = vector.load %arg4[%c0_2, %c0_3] : memref<128x128xf32, #tpu.memory_space<vmem>>, vector<128x128xf32>
    %c0_4 = arith.constant 0 : index
    %c0_5 = arith.constant 0 : index
    %5 = vector.load %arg7[%c0_4, %c0_5] : memref<8x128xf32, #tpu.memory_space<vmem>>, vector<8x128xf32>
    %cst = arith.constant dense<0.000000e+00> : vector<8x128xf32>
    %6 = tpu.matmul %3, %4, %cst {dimension_numbers = #tpu.dot_dimension_numbers<[1], [0], [0], [1], [0, 0, 1, 1], [], []>} : vector<8x128xf32>, vector<128x128xf32>, vector<8x128xf32> -> vector<8x128xf32>
    %7 = arith.addf %5, %6 : vector<8x128xf32>
    %c0_6 = arith.constant 0 : index
    %c0_7 = arith.constant 0 : index
    %8 = vector.load %arg7[%c0_6, %c0_7] : memref<8x128xf32, #tpu.memory_space<vmem>>, vector<8x128xf32>
    tpu.vector_store %arg7[%c0_6, %c0_7], %7 {strides = array<i32>} : memref<8x128xf32, #tpu.memory_space<vmem>>, vector<8x128xf32>,
    %c0_8 = arith.constant 0 : index
    %c0_9 = arith.constant 0 : index
    %9 = vector.load %arg8[%c0_8, %c0_9] : memref<8x1xf32, #tpu.memory_space<vmem>>, vector<8x1xf32>
    %10 = arith.mulf %3, %3 : vector<8x128xf32>
    %cst_10 = arith.constant dense<0.000000e+00> : vector<8xf32>
    %11 = vector.multi_reduction <add>, %10, %cst_10 [1] : vector<8x128xf32> to vector<8xf32>
    %12 = vector.shape_cast %11 : vector<8xf32> to vector<8x1xf32>
    %13 = arith.addf %9, %12 : vector<8x1xf32>
    %c0_11 = arith.constant 0 : index
    %c0_12 = arith.constant 0 : index
    %14 = vector.load %arg8[%c0_11, %c0_12] : memref<8x1xf32, #tpu.memory_space<vmem>>, vector<8x1xf32>
    tpu.vector_store %arg8[%c0_11, %c0_12], %13 {strides = array<i32>} : memref<8x1xf32, #tpu.memory_space<vmem>>, vector<8x1xf32>,
    %c0_i32_13 = arith.constant 0 : i32
    %15 = arith.cmpi eq, %arg2, %c0_i32_13 : i32
    %16 = arith.extui %15 : i1 to i32
    %c0_i32_14 = arith.constant 0 : i32
    %17 = arith.cmpi ne, %16, %c0_i32_14 : i32
    scf.if %17 {
      %c0_15 = arith.constant 0 : index
      %c0_16 = arith.constant 0 : index
      %18 = vector.load %arg8[%c0_15, %c0_16] : memref<8x1xf32, #tpu.memory_space<vmem>>, vector<8x1xf32>
      %cst_17 = arith.constant 1.000000e-24 : f32
      %19 = vector.broadcast %cst_17 : f32 to vector<8x1xf32>
      %20 = arith.maximumf %18, %19 : vector<8x1xf32>
      %21 = math.rsqrt %20 : vector<8x1xf32>
      %c0_18 = arith.constant 0 : index
      %c0_19 = arith.constant 0 : index
      %22 = vector.load %arg7[%c0_18, %c0_19] : memref<8x128xf32, #tpu.memory_space<vmem>>, vector<8x128xf32>
      %23 = vector.broadcast %21 : vector<8x1xf32> to vector<8x128xf32>
      %24 = arith.mulf %22, %23 : vector<8x128xf32>
      %c0_20 = arith.constant 0 : index
      %c0_21 = arith.constant 0 : index
      %25 = vector.load %arg5[%c0_20, %c0_21] : memref<1x128xf32, #tpu.memory_space<vmem>>, vector<1x128xf32>
      %26 = vector.broadcast %25 : vector<1x128xf32> to vector<8x128xf32>
      %27 = arith.mulf %24, %26 : vector<8x128xf32>
      %c0_22 = arith.constant 0 : index
      %c0_23 = arith.constant 0 : index
      %28 = vector.load %arg6[%c0_22, %c0_23] : memref<8x128xf32, #tpu.memory_space<vmem>>, vector<8x128xf32>
      tpu.vector_store %arg6[%c0_22, %c0_23], %27 {strides = array<i32>} : memref<8x128xf32, #tpu.memory_space<vmem>>, vector<8x128xf32>,
    } else {
    }
    return
  }
  func.func @transform_0(%arg0: i32, %arg1: i32, %arg2: i32) -> (i32, i32) {
    %c0_i32 = arith.constant 0 : i32
    return %arg0, %arg2 : i32, i32
  }
  func.func @transform_1(%arg0: i32, %arg1: i32, %arg2: i32) -> (i32, i32) {
    %c0_i32 = arith.constant 0 : i32
    return %arg2, %arg1 : i32, i32
  }
  func.func @transform_2(%arg0: i32, %arg1: i32, %arg2: i32) -> (i32, i32) {
    %c0_i32 = arith.constant 0 : i32
    %c0_i32_0 = arith.constant 0 : i32
    return %c0_i32, %arg1 : i32, i32
  }
  func.func @transform_3(%arg0: i32, %arg1: i32, %arg2: i32) -> (i32, i32) {
    %c0_i32 = arith.constant 0 : i32
    return %arg0, %arg1 : i32, i32
  }
}

</mosaic_0001>

<llo_original>
// kernel: tpu_custom_call.1
$region0: #{tpu_custom_call.1}
  #allocation0 [shape = 'u32[]', space=smem, size = 0x4, offset = 0x4, fixed_abs, tag = 'smem constant byte address 0x4 - core index']
  #allocation1 [shape = 'u32[144,128]{1,0:T(1,128)}', space=vmem, size = 0x12000, scoped, tag = 'internal scratch']
  #allocation2 [shape = 'f32[8,128]{1,0:T(8,128)}', space=vmem, size = 0x1000, scoped, tag = 'scratch operand']
  #allocation3 [shape = 'f32[8,1]{1,0:T(8,128)}', space=vmem, size = 0x1000, scoped, tag = 'scratch operand']
  %s0 = inlined_call_operand.hbm [shape: f32[8,128], index: 0, kind: input, shape index: {}]
  %s1 = inlined_call_operand.hbm [shape: f32[128,128], index: 1, kind: input, shape index: {}]
  %s2 = inlined_call_operand.vmem [shape: f32[1,128], index: 2, kind: input, shape index: {}]
  %s3 = inlined_call_operand.hbm [shape: f32[8,128], index: 3, kind: output, shape index: {}]
  %s4 = sld [smem:[#allocation0]]
  $region38: #{tpu_custom_call.1} parent=0
    _
  %s6 = ssub.s32 1, %s4
  %s7 = scalar_select 0, %s6, %s4
  $region1: #{tpu_custom_call.1} parent=0
    #allocation4 [shape = 'u8[4096]{0}', space=vmem, size = 0x1000, scoped, tag = 'input window, operand 0, single buffered']
    #allocation5 [shape = 's32[1]{0}', space=sflag, size = 0x4, scoped, tag = 'scoped memory for tpu_custom_call.1']
    #allocation6 [shape = 's32[1]{0}', space=sflag, size = 0x4, scoped, tag = 'scoped memory for tpu_custom_call.1']
    #allocation7 [shape = 'u8[65536]{0}', space=vmem, size = 0x10000, scoped, tag = 'input window, operand 1, single buffered']
    #allocation8 [shape = 's32[1]{0}', space=sflag, size = 0x4, scoped, tag = 'scoped memory for tpu_custom_call.1']
    #allocation9 [shape = 'u8[4096]{0}', space=vmem, size = 0x1000, scoped, tag = 'output window, operand 0, single buffered']
    %8 = vsyncpa [#allocation5], 0
    %9 = vsyncpa [#allocation8], 0
    %10 = vsyncpa [#allocation6], 0
    // Predicated region
    $region2: #{tpu_custom_call.1} parent=1 // pred_check
      _
    $region3: #{tpu_custom_call.1} parent=1 // pred_check_branch
      %12 = sbr.rel (0) target = $region5
    $region4: #{tpu_custom_call.1} parent=1 // pred_region
      %s14 = ssub.s32 128, 128
      %15 = vsyncadd [#allocation5], %s14
      %s17 = sshll.u32 [#allocation4], 4
      %s18 = int_to_ptr.vmem [resolvable:$true] %s17
      %20 = dma.hbm_to_vmem [thread:$0]  %s0, 128, %s18, [#allocation5]
    $region5: #{tpu_custom_call.1} parent=1 // pred_fallthru
      _
    // Predicated region
    $region6: #{tpu_custom_call.1} parent=1 // pred_check
      _
    $region7: #{tpu_custom_call.1} parent=1 // pred_check_branch
      %22 = sbr.rel (0) target = $region9
    $region8: #{tpu_custom_call.1} parent=1 // pred_region
      %s24 = ssub.s32 2048, 2048
      %25 = vsyncadd [#allocation8], %s24
      %s26 = sshll.u32 [#allocation7], 4
      %s27 = int_to_ptr.vmem [resolvable:$true] %s26
      %32 = dma.hbm_to_vmem [thread:$0]  %s1, 2048, %s27, [#allocation8], 128, 128, 8
    $region9: #{tpu_custom_call.1} parent=1 // pred_fallthru
      _
    // Predicated region
    $region10: #{tpu_custom_call.1} parent=1 // pred_check
      _
    $region11: #{tpu_custom_call.1} parent=1 // pred_check_branch
      %34 = sbr.rel (0) target = $region13
    $region12: #{tpu_custom_call.1} parent=1 // pred_region
      _
    $region13: #{tpu_custom_call.1} parent=1 // pred_fallthru
      _
    // Predicated region
    $region14: #{tpu_custom_call.1} parent=1 // pred_check
      _
    $region15: #{tpu_custom_call.1} parent=1 // pred_check_branch
      %36 = sbr.rel (0) target = $region17
    $region16: #{tpu_custom_call.1} parent=1 // pred_region
      %37 = dma.done [#allocation5], 128
    $region17: #{tpu_custom_call.1} parent=1 // pred_fallthru
      _
    // Predicated region
    $region18: #{tpu_custom_call.1} parent=1 // pred_check
      _
    $region19: #{tpu_custom_call.1} parent=1 // pred_check_branch
      %39 = sbr.rel (0) target = $region21
    $region20: #{tpu_custom_call.1} parent=1 // pred_region
      %40 = dma.done [#allocation8], 2048
    $region21: #{tpu_custom_call.1} parent=1 // pred_fallthru
      _
    %p41 = scmp.eq.s32.totalorder 0, 0
    // Predicated region
    $region22: #{tpu_custom_call.1} parent=1 // pred_check
      %p42 = pneg %p41
    $region23: #{tpu_custom_call.1} parent=1 // pred_check_branch
      %44 = sbr.rel (%p42) target = $region25
    $region24: #{tpu_custom_call.1} parent=1 // pred_region
      %45 = vst [vmem:[#allocation2] sm:$0xff] 0.0
      %vm46 = vcmask 7168
      %47 = vst.msk [vmem:[#allocation3] sm:$0xff] %vm46, 0.0
    $region25: #{tpu_custom_call.1} parent=1 // pred_fallthru
      _
    %v48 = vld [vmem:[#allocation4] sm:$0xff]
    %v49 = vld [vmem:[#allocation7] sm:$0xff]
    %v50 = vld [vmem:[#allocation7 + $0x8] sm:$0xff]
    %v51 = vld [vmem:[#allocation7 + $0x10] sm:$0xff]
    %v52 = vld [vmem:[#allocation7 + $0x18] sm:$0xff]
    %v53 = vld [vmem:[#allocation7 + $0x20] sm:$0xff]
    %v54 = vld [vmem:[#allocation7 + $0x28] sm:$0xff]
    %v55 = vld [vmem:[#allocation7 + $0x30] sm:$0xff]
    %v56 = vld [vmem:[#allocation7 + $0x38] sm:$0xff]
    %v57 = vld [vmem:[#allocation7 + $0x40] sm:$0xff]
    %v58 = vld [vmem:[#allocation7 + $0x48] sm:$0xff]
    %v59 = vld [vmem:[#allocation7 + $0x50] sm:$0xff]
    %v60 = vld [vmem:[#allocation7 + $0x58] sm:$0xff]
    %v61 = vld [vmem:[#allocation7 + $0x60] sm:$0xff]
    %v62 = vld [vmem:[#allocation7 + $0x68] sm:$0xff]
    %v63 = vld [vmem:[#allocation7 + $0x70] sm:$0xff]
    %v64 = vld [vmem:[#allocation7 + $0x78] sm:$0xff]
    %v65 = vld [vmem:[#allocation2] sm:$0xff]
    %66 = vmatprep.subr.mxu0 0.0
    %67 = vmatpush1.msra.mxu0 %v49
    %68 = vmatprep.subr.mxu0 0.0
    %69 = vmatpush1.msra.mxu0 %v50
    %70 = vmatprep.subr.mxu0 0.0
    %71 = vmatpush1.msra.mxu0 %v51
    %72 = vmatprep.subr.mxu0 0.0
    %73 = vmatpush1.msra.mxu0 %v52
    %74 = vmatprep.subr.mxu0 0.0
    %75 = vmatpush1.msra.mxu0 %v53
    %76 = vmatprep.subr.mxu0 0.0
    %77 = vmatpush1.msra.mxu0 %v54
    %78 = vmatprep.subr.mxu0 0.0
    %79 = vmatpush1.msra.mxu0 %v55
    %80 = vmatprep.subr.mxu0 0.0
    %81 = vmatpush1.msra.mxu0 %v56
    %82 = vmatprep.subr.mxu0 0.0
    %83 = vmatpush1.msra.mxu0 %v57
    %84 = vmatprep.subr.mxu0 0.0
    %85 = vmatpush1.msra.mxu0 %v58
    %86 = vmatprep.subr.mxu0 0.0
    %87 = vmatpush1.msra.mxu0 %v59
    %88 = vmatprep.subr.mxu0 0.0
    %89 = vmatpush1.msra.mxu0 %v60
    %90 = vmatprep.subr.mxu0 0.0
    %91 = vmatpush1.msra.mxu0 %v61
    %92 = vmatprep.subr.mxu0 0.0
    %93 = vmatpush1.msra.mxu0 %v62
    %94 = vmatprep.subr.mxu0 0.0
    %95 = vmatpush1.msra.mxu0 %v63
    %96 = vmatprep.subr.mxu0 0.0
    %97 = vmatpush1.msra.mxu0 %v64
    %98 = vmatprep.subr.mxu0 0.0
    %99 = vmatpush1.msra.mxu0 0.0
    %100 = vmatprep.subr.mxu0 0.0
    %101 = vmatpush1.msra.mxu0 0.0
    %102 = vmatprep.subr.mxu0 0.0
    %103 = vmatpush1.msra.mxu0 0.0
    %104 = vmatprep.subr.mxu0 0.0
    %105 = vmatpush1.msra.mxu0 0.0
    %106 = vmatprep.subr.mxu0 0.0
    %107 = vmatpush1.msra.mxu0 0.0
    %108 = vmatprep.subr.mxu0 0.0
    %109 = vmatpush1.msra.mxu0 0.0
    %110 = vmatprep.subr.mxu0 0.0
    %111 = vmatpush1.msra.mxu0 0.0
    %112 = vmatprep.subr.mxu0 0.0
    %113 = vmatpush1.msra.mxu0 0.0
    %114 = vmatprep.subr.mxu0 0.0
    %115 = vmatpush1.msra.mxu0 0.0
    %116 = vmatprep.subr.mxu0 0.0
    %117 = vmatpush1.msra.mxu0 0.0
    %118 = vmatprep.subr.mxu0 0.0
    %119 = vmatpush1.msra.mxu0 0.0
    %120 = vmatprep.subr.mxu0 0.0
    %121 = vmatpush1.msra.mxu0 0.0
    %122 = vmatprep.subr.mxu0 0.0
    %123 = vmatpush1.msra.mxu0 0.0
    %124 = vmatprep.subr.mxu0 0.0
    %125 = vmatpush1.msra.mxu0 0.0
    %126 = vmatprep.subr.mxu0 0.0
    %127 = vmatpush1.msra.mxu0 0.0
    %128 = vmatprep.subr.mxu0 0.0
    %129 = vmatpush1.msra.mxu0 0.0
    %130 = vmatprep.mubr.f32.mxu0 0.0
    %131 = vmatmul.mubr.f32.gmra.mrb[0].mxu0 %v48
    %v132 = vpop.f32.mrb[0].mxu0
    %v133 = vadd.f32 0.0, %v132
    %v134 = vpop.f32.mrb[0].mxu0
    %135 = vdwg.mxu0
    %v136 = vadd.f32 %v65, %v133
    %137 = vst [vmem:[#allocation2] sm:$0xff] %v136
    %v138 = vld [vmem:[#allocation3] sm:$0xff]
    %v139 = vmul.f32 %v48, %v48
    %140 = vadd.xlane.f32.xlu0 %v139
    %v141 = vpop.xlane.xlu0 %140
    %v142 = vadd.f32 %v138, %v141
    %vm143 = vcmask 7168
    %144 = vst.msk [vmem:[#allocation3] sm:$0xff] %vm143, %v142
    // Predicated region
    $region26: #{tpu_custom_call.1} parent=1 // pred_check
      %p145 = pneg %p41
    $region27: #{tpu_custom_call.1} parent=1 // pred_check_branch
      %147 = sbr.rel (%p145) target = $region29
    $region28: #{tpu_custom_call.1} parent=1 // pred_region
      %v148 = vld [vmem:[#allocation3] sm:$0xff]
      %v149 = vmax.f32 %v148, 1e-24
      %v150 = vrsqrt.pop %v149
      %v151 = vld [vmem:[#allocation2] sm:$0xff]
      %153 = vset.pattern.permute.xlu0 0
      %154 = vperm.xlu0 %153, %v150
      %v155 = vpop.permute.xlu0 %154
      %v157 = vmul.f32 %v151, %v155
      %v158 = vld [vmem:[%s2] sm:$0x1]
      %v160 = vlaneseq
      %v161 = vshrl.u32 %v160, 7
      %v162 = vsub.s32 0, %v161
      %v163 = vrot.slane %v158, %v162
      %v165 = vmul.f32 %v157, %v163
      %166 = vst [vmem:[#allocation9] sm:$0xff] %v165
    $region29: #{tpu_custom_call.1} parent=1 // pred_fallthru
      _
    // Predicated region
    $region30: #{tpu_custom_call.1} parent=1 // pred_check
      _
    $region31: #{tpu_custom_call.1} parent=1 // pred_check_branch
      %168 = sbr.rel (0) target = $region33
    $region32: #{tpu_custom_call.1} parent=1 // pred_region
      %s170 = ssub.s32 128, 128
      %171 = vsyncadd [#allocation6], %s170
      %s173 = sshll.u32 [#allocation9], 4
      %s174 = int_to_ptr.vmem [resolvable:$true] %s173
      %176 = dma.vmem_to_hbm [thread:$0]  %s174, 128, %s3, [#allocation6]
    $region33: #{tpu_custom_call.1} parent=1 // pred_fallthru
      _
    // Predicated region
    $region34: #{tpu_custom_call.1} parent=1 // pred_check
      _
    $region35: #{tpu_custom_call.1} parent=1 // pred_check_branch
      %178 = sbr.rel (0) target = $region37
    $region36: #{tpu_custom_call.1} parent=1 // pred_region
      %179 = dma.done [#allocation6], 128
    $region37: #{tpu_custom_call.1} parent=1 // pred_fallthru
      _
    %180 = vsyncpa [#allocation5], 1
    %181 = vsyncpa [#allocation8], 1
    %182 = vsyncpa [#allocation6], 1

</llo_original>
